<compile_context>
chip_gen: v6e
topology: v6e:2x2x1
jax: 0.10.0
libtpu: 0.0.40
codegen_flags: <defaults>
</compile_context>

<pallas_src>
import jax
import jax.numpy as jnp
from jax import lax
from jax.experimental import pallas as pl
from jax.experimental.pallas import tpu as pltpu

HIDDEN = 128


def _round_up(x, m):
    return ((x + m - 1) // m) * m


def _cdiv(a, b):
    return (a + b - 1) // b


def _valuenet_kernel(x_ref, w1_ref, b1_ref, w2_ref, b2_ref, w3_ref, b3_ref, o_ref):
    # x:  (TILE_B, S_DIM) f32      w1: (S_DIM, 128) bf16   b1: (1, 128) f32
    # w2: (128, 128)      bf16     b2: (1, 128)     f32
    # w3: (1, 128)        f32      b3: (1, 1)       f32
    # o:  (1, TILE_B)     f32      (lane-dense 2-D output block)
    x = x_ref[...].astype(jnp.bfloat16)               # in-kernel cast: VPU filler

    h1 = jnp.dot(x, w1_ref[...], preferred_element_type=jnp.float32)
    h1 = jnp.maximum(h1 + b1_ref[...], 0.0).astype(jnp.bfloat16)     # (TILE_B, 128)

    h2 = jnp.dot(h1, w2_ref[...], preferred_element_type=jnp.float32)
    h2 = jnp.maximum(h2 + b2_ref[...], 0.0)                          # (TILE_B, 128) f32

    # out_dim == 1 head: contract h2's hidden dim against w3 (A @ B.T pattern),
    # result is a lane-dense (1, TILE_B) row -> unmasked vst into the output.
    out = lax.dot_general(w3_ref[...], h2, (((1,), (1,)), ((), ())),
                          preferred_element_type=jnp.float32)        # (1, TILE_B)
    o_ref[...] = (out + b3_ref[...]).astype(o_ref.dtype)


def valuenet_forward(state, params, *, tile_b_max=4096):
    """state: (B, s_dim) float32 -> (B,) float32 (== ValueNet.main(state)[:, 0]).

    Invariant: rows of a ragged last batch tile compute on garbage and are
    discarded by the final [:B] slice. Safe only while the model has no
    cross-row reduction (e.g. a batch-mean head would break this).
    """
    w1, b1, w2, b2, w3, b3 = params
    B, s_dim = state.shape
    assert w1.shape == (s_dim, HIDDEN)

    # ---- batch tiling: no HBM pad/copy of `state` ----
    if B <= 128:
        tile_b = B                                   # single exact block, no raggedness
    else:
        tile_b = min(tile_b_max, _round_up(B, 128))  # multiple of 128 (lane-dense output)
        if _cdiv(B, tile_b) < 2:
            # >= 2 parallel tiles so both v7x TensorCores get work; costs only one
            # extra ~0.35us grid step on single-TC v5e/v6e.
            tile_b = max(128, _round_up(_cdiv(B, 2), 128))
    num_tiles = _cdiv(B, tile_b)
    b_ceil = num_tiles * tile_b

    # ---- tiny one-time weight casts (state itself stays raw f32) ----
    w1_bf = w1.astype(jnp.bfloat16)
    w2_bf = w2.astype(jnp.bfloat16)
    b1_f = b1.reshape(1, HIDDEN).astype(jnp.float32)
    b2_f = b2.reshape(1, HIDDEN).astype(jnp.float32)
    w3_row = w3.reshape(1, HIDDEN).astype(jnp.float32)   # final layer stays f32
    b3_s = b3.reshape(1, 1).astype(jnp.float32)

    flops = 2 * b_ceil * (s_dim * HIDDEN + HIDDEN * HIDDEN + HIDDEN)
    bytes_accessed = (state.size * state.dtype.itemsize           # f32 state read
                      + w1_bf.size * 2 + w2_bf.size * 2
                      + (b1_f.size + b2_f.size + w3_row.size + b3_s.size) * 4
                      + b_ceil * 4)                               # f32 output write

    def resident(a):
        n = a.ndim
        return pl.BlockSpec(a.shape, lambda i, _n=n: (0,) * _n)

    out = pl.pallas_call(
        _valuenet_kernel,
        out_shape=jax.ShapeDtypeStruct((1, b_ceil), jnp.float32),
        grid=(num_tiles,),
        in_specs=[
            pl.BlockSpec((tile_b, s_dim), lambda i: (i, 0)),      # state: batch-tiled
            resident(w1_bf), resident(b1_f),
            resident(w2_bf), resident(b2_f),
            resident(w3_row), resident(b3_s),
        ],
        out_specs=pl.BlockSpec((1, tile_b), lambda i: (0, i)),    # lane-dense output row
        compiler_params=pltpu.CompilerParams(
            dimension_semantics=("parallel",),
            vmem_limit_bytes=32 * 1024 * 1024),
        cost_estimate=pl.CostEstimate(
            flops=flops, transcendentals=0, bytes_accessed=bytes_accessed),
    )(state, w1_bf, b1_f, w2_bf, b2_f, w3_row, b3_s)

    return out[0, :B]


def init_params(key, s_dim, hidden=HIDDEN):
    """Mimics PyTorch nn.Linear default init (U(-1/sqrt(fan_in), 1/sqrt(fan_in))).
    Weights stored as (in_dim, out_dim)."""
    def linear(k, fan_in, fan_out):
        kw, kb = jax.random.split(k)
        bound = 1.0 / jnp.sqrt(fan_in)
        w = jax.random.uniform(kw, (fan_in, fan_out), jnp.float32, -bound, bound)
        b = jax.random.uniform(kb, (1, fan_out), jnp.float32, -bound, bound)
        return w, b

    k1, k2, k3 = jax.random.split(key, 3)
    w1, b1 = linear(k1, s_dim, hidden)
    w2, b2 = linear(k2, hidden, hidden)
    w3, b3 = linear(k3, hidden, 1)
    return (w1, b1, w2, b2, w3, b3)


def _reference(state, params):
    """Pure-JAX reference with the same bf16 rounding / f32 accumulation as the kernel."""
    w1, b1, w2, b2, w3, b3 = params
    x = state.astype(jnp.bfloat16)
    h = jnp.dot(x, w1.astype(jnp.bfloat16), preferred_element_type=jnp.float32)
    h = jnp.maximum(h + b1, 0.0).astype(jnp.bfloat16)
    h = jnp.dot(h, w2.astype(jnp.bfloat16), preferred_element_type=jnp.float32)
    h = jnp.maximum(h + b2, 0.0)
    return (jnp.dot(h, w3, preferred_element_type=jnp.float32) + b3)[:, 0]


if __name__ == "__main__":
    S_DIM = 24      # BipedalWalker-v3 observation_space.shape[0]

    key = jax.random.PRNGKey(0)
    k_params, k_s1, k_s2 = jax.random.split(key, 3)
    params = init_params(k_params, S_DIM)

    # Small batch: single exact block (B <= 128), no raggedness anywhere.
    state1 = jax.random.normal(k_s1, (8, S_DIM), dtype=jnp.float32)
    out1 = jax.block_until_ready(valuenet_forward(state1, params))
    ref1 = _reference(state1, params)
    assert out1.shape == (8,)
    assert jnp.allclose(out1, ref1, atol=2e-3, rtol=2e-3), (out1, ref1)

    # B=300 with default tiling: forced >=2 tiles (256+256) with a ragged last tile.
    state2 = jax.random.normal(k_s2, (300, S_DIM), dtype=jnp.float32)
    out2 = jax.block_until_ready(valuenet_forward(state2, params))
    ref2 = _reference(state2, params)
    assert out2.shape == (300,)
    assert jnp.allclose(out2, ref2, atol=2e-3, rtol=2e-3), (out2, ref2)

    # Forced small tiles: grid of 3 (128+128+ragged 44), exercises multi-step pipeline.
    out3 = jax.block_until_ready(valuenet_forward(state2, params, tile_b_max=128))
    assert out3.shape == (300,)
    assert jnp.allclose(out3, ref2, atol=2e-3, rtol=2e-3), (out3, ref2)

    print("KERNEL_OK")
</pallas_src>

<mosaic_0001>
module attributes {stable_mosaic.version = 11 : i64} {
  func.func @_valuenet_kernel(%arg0: i32, %arg1: memref<8x24xf32, #tpu.memory_space<vmem>>, %arg2: memref<24x128xbf16, #tpu.memory_space<vmem>>, %arg3: memref<1x128xf32, #tpu.memory_space<vmem>>, %arg4: memref<128x128xbf16, #tpu.memory_space<vmem>>, %arg5: memref<1x128xf32, #tpu.memory_space<vmem>>, %arg6: memref<1x128xf32, #tpu.memory_space<vmem>>, %arg7: memref<1x1xf32, #tpu.memory_space<vmem>>, %arg8: memref<1x8xf32, #tpu.memory_space<vmem>>) attributes {dimension_semantics = [#tpu.dimension_semantics<parallel>], iteration_bounds = array<i64: 1>, scalar_prefetch = 0 : i64, scratch_operands = 0 : i64, tpu.core_type = #tpu.core_type<tc>, window_params = [{transform_indices = @transform_0, window_bounds = array<i64: 8, 24>}, {pipeline_mode = #tpu.pipeline_mode<synchronous>, transform_indices = @transform_1, window_bounds = array<i64: 24, 128>}, {pipeline_mode = #tpu.pipeline_mode<synchronous>, transform_indices = @transform_2, window_bounds = array<i64: 1, 128>}, {pipeline_mode = #tpu.pipeline_mode<synchronous>, transform_indices = @transform_3, window_bounds = array<i64: 128, 128>}, {pipeline_mode = #tpu.pipeline_mode<synchronous>, transform_indices = @transform_4, window_bounds = array<i64: 1, 128>}, {pipeline_mode = #tpu.pipeline_mode<synchronous>, transform_indices = @transform_5, window_bounds = array<i64: 1, 128>}, {pipeline_mode = #tpu.pipeline_mode<synchronous>, transform_indices = @transform_6, window_bounds = array<i64: 1, 1>}, {transform_indices = @transform_7, window_bounds = array<i64: 1, 8>}]} {
    %c0 = arith.constant 0 : index
    %c0_0 = arith.constant 0 : index
    %0 = vector.load %arg1[%c0, %c0_0] : memref<8x24xf32, #tpu.memory_space<vmem>>, vector<8x24xf32>
    %1 = arith.truncf %0 : vector<8x24xf32> to vector<8x24xbf16>
    %c0_1 = arith.constant 0 : index
    %c0_2 = arith.constant 0 : index
    %2 = vector.load %arg2[%c0_1, %c0_2] : memref<24x128xbf16, #tpu.memory_space<vmem>>, vector<24x128xbf16>
    %cst = arith.constant dense<0.000000e+00> : vector<8x128xf32>
    %3 = tpu.matmul %1, %2, %cst {dimension_numbers = #tpu.dot_dimension_numbers<[1], [0], [0], [1], [0, 0, 1, 1], [], []>} : vector<8x24xbf16>, vector<24x128xbf16>, vector<8x128xf32> -> vector<8x128xf32>
    %c0_3 = arith.constant 0 : index
    %c0_4 = arith.constant 0 : index
    %4 = vector.load %arg3[%c0_3, %c0_4] : memref<1x128xf32, #tpu.memory_space<vmem>>, vector<1x128xf32>
    %5 = vector.broadcast %4 : vector<1x128xf32> to vector<8x128xf32>
    %6 = arith.addf %3, %5 : vector<8x128xf32>
    %cst_5 = arith.constant 0.000000e+00 : f32
    %7 = vector.broadcast %cst_5 : f32 to vector<8x128xf32>
    %8 = arith.maximumf %6, %7 : vector<8x128xf32>
    %9 = arith.truncf %8 : vector<8x128xf32> to vector<8x128xbf16>
    %c0_6 = arith.constant 0 : index
    %c0_7 = arith.constant 0 : index
    %10 = vector.load %arg4[%c0_6, %c0_7] : memref<128x128xbf16, #tpu.memory_space<vmem>>, vector<128x128xbf16>
    %cst_8 = arith.constant dense<0.000000e+00> : vector<8x128xf32>
    %11 = tpu.matmul %9, %10, %cst_8 {dimension_numbers = #tpu.dot_dimension_numbers<[1], [0], [0], [1], [0, 0, 1, 1], [], []>} : vector<8x128xbf16>, vector<128x128xbf16>, vector<8x128xf32> -> vector<8x128xf32>
    %c0_9 = arith.constant 0 : index
    %c0_10 = arith.constant 0 : index
    %12 = vector.load %arg5[%c0_9, %c0_10] : memref<1x128xf32, #tpu.memory_space<vmem>>, vector<1x128xf32>
    %13 = vector.broadcast %12 : vector<1x128xf32> to vector<8x128xf32>
    %14 = arith.addf %11, %13 : vector<8x128xf32>
    %cst_11 = arith.constant 0.000000e+00 : f32
    %15 = vector.broadcast %cst_11 : f32 to vector<8x128xf32>
    %16 = arith.maximumf %14, %15 : vector<8x128xf32>
    %c0_12 = arith.constant 0 : index
    %c0_13 = arith.constant 0 : index
    %17 = vector.load %arg6[%c0_12, %c0_13] : memref<1x128xf32, #tpu.memory_space<vmem>>, vector<1x128xf32>
    %cst_14 = arith.constant dense<0.000000e+00> : vector<1x8xf32>
    %18 = tpu.matmul %17, %16, %cst_14 {dimension_numbers = #tpu.dot_dimension_numbers<[1], [1], [0], [0], [0, 0, 1, 0], [], []>} : vector<1x128xf32>, vector<8x128xf32>, vector<1x8xf32> -> vector<1x8xf32>
    %c0_15 = arith.constant 0 : index
    %c0_16 = arith.constant 0 : index
    %19 = vector.load %arg7[%c0_15, %c0_16] : memref<1x1xf32, #tpu.memory_space<vmem>>, vector<1x1xf32>
    %20 = vector.broadcast %19 : vector<1x1xf32> to vector<1x8xf32>
    %21 = arith.addf %18, %20 : vector<1x8xf32>
    %c0_17 = arith.constant 0 : index
    %c0_18 = arith.constant 0 : index
    %22 = vector.load %arg8[%c0_17, %c0_18] : memref<1x8xf32, #tpu.memory_space<vmem>>, vector<1x8xf32>
    tpu.vector_store %arg8[%c0_17, %c0_18], %21 {strides = array<i32>} : memref<1x8xf32, #tpu.memory_space<vmem>>, vector<1x8xf32>,
    return
  }
  func.func @transform_0(%arg0: i32) -> (i32, i32) {
    %c0_i32 = arith.constant 0 : i32
    %c0_i32_0 = arith.constant 0 : i32
    return %arg0, %c0_i32 : i32, i32
  }
  func.func @transform_1(%arg0: i32) -> (i32, i32) {
    %c0_i32 = arith.constant 0 : i32
    %c0_i32_0 = arith.constant 0 : i32
    %c0_i32_1 = arith.constant 0 : i32
    return %c0_i32, %c0_i32_0 : i32, i32
  }
  func.func @transform_2(%arg0: i32) -> (i32, i32) {
    %c0_i32 = arith.constant 0 : i32
    %c0_i32_0 = arith.constant 0 : i32
    %c0_i32_1 = arith.constant 0 : i32
    return %c0_i32, %c0_i32_0 : i32, i32
  }
  func.func @transform_3(%arg0: i32) -> (i32, i32) {
    %c0_i32 = arith.constant 0 : i32
    %c0_i32_0 = arith.constant 0 : i32
    %c0_i32_1 = arith.constant 0 : i32
    return %c0_i32, %c0_i32_0 : i32, i32
  }
  func.func @transform_4(%arg0: i32) -> (i32, i32) {
    %c0_i32 = arith.constant 0 : i32
    %c0_i32_0 = arith.constant 0 : i32
    %c0_i32_1 = arith.constant 0 : i32
    return %c0_i32, %c0_i32_0 : i32, i32
  }
  func.func @transform_5(%arg0: i32) -> (i32, i32) {
    %c0_i32 = arith.constant 0 : i32
    %c0_i32_0 = arith.constant 0 : i32
    %c0_i32_1 = arith.constant 0 : i32
    return %c0_i32, %c0_i32_0 : i32, i32
  }
  func.func @transform_6(%arg0: i32) -> (i32, i32) {
    %c0_i32 = arith.constant 0 : i32
    %c0_i32_0 = arith.constant 0 : i32
    %c0_i32_1 = arith.constant 0 : i32
    return %c0_i32, %c0_i32_0 : i32, i32
  }
  func.func @transform_7(%arg0: i32) -> (i32, i32) {
    %c0_i32 = arith.constant 0 : i32
    %c0_i32_0 = arith.constant 0 : i32
    return %c0_i32, %arg0 : i32, i32
  }
}

</mosaic_0001>

<llo_original>
// kernel: tpu_custom_call.1
$region0: #{tpu_custom_call.1}
  #allocation0 [shape = 'u32[]', space=smem, size = 0x4, offset = 0x4, fixed_abs, tag = 'smem constant byte address 0x4 - core index']
  #allocation1 [shape = 'u32[144,128]{1,0:T(1,128)}', space=vmem, size = 0x12000, scoped, tag = 'internal scratch']
  #allocation2 [shape = 'f32[1,1]{1,0:T(1,128)S(1)}', space=vmem, size = 0x200, scoped, tag = 'scoped memory for tpu_custom_call.1']
  %s0 = inlined_call_operand.hbm [shape: f32[8,24], index: 0, kind: input, shape index: {}]
  %s1 = inlined_call_operand.hbm [shape: bf16[24,128], index: 1, kind: input, shape index: {}]
  %s2 = inlined_call_operand.vmem [shape: f32[1,128], index: 2, kind: input, shape index: {}]
  %s3 = inlined_call_operand.hbm [shape: bf16[128,128], index: 3, kind: input, shape index: {}]
  %s4 = inlined_call_operand.vmem [shape: f32[1,128], index: 4, kind: input, shape index: {}]
  %s5 = inlined_call_operand.vmem [shape: f32[1,128], index: 5, kind: input, shape index: {}]
  %s6 = inlined_call_operand.<no memory space> [shape: f32[1,1], index: 6, kind: input, shape index: {}]
  %s7 = inlined_call_operand.hbm [shape: f32[1,8], index: 7, kind: output, shape index: {}]
  %s8 = sld [smem:[#allocation0]]
  $region50: #{tpu_custom_call.1} parent=0
    _
  %s10 = ssub.s32 1, %s8
  %s11 = scalar_select 0, %s10, %s8
  %v12 = vstv %s6
  %13 = vst [vmem:[#allocation2] sm:$0x1] %v12
  $region1: #{tpu_custom_call.1} parent=0
    #allocation3 [shape = 'u8[4096]{0}', space=vmem, size = 0x1000, scoped, tag = 'input window, operand 0, single buffered']
    #allocation4 [shape = 's32[1]{0}', space=sflag, size = 0x4, scoped, tag = 'scoped memory for tpu_custom_call.1']
    #allocation5 [shape = 's32[1]{0}', space=sflag, size = 0x4, scoped, tag = 'scoped memory for tpu_custom_call.1']
    #allocation6 [shape = 'u8[6144]{0}', space=vmem, size = 0x1800, scoped, tag = 'input window, operand 1, single buffered']
    #allocation7 [shape = 's32[1]{0}', space=sflag, size = 0x4, scoped, tag = 'scoped memory for tpu_custom_call.1']
    #allocation8 [shape = 'u8[32768]{0}', space=vmem, size = 0x8000, scoped, tag = 'input window, operand 3, single buffered']
    #allocation9 [shape = 'u8[512]{0}', space=vmem, size = 0x400, scoped, tag = 'output window, operand 0, single buffered']
    %14 = vsyncpa [#allocation4], 0
    %15 = vsyncpa [#allocation7], 0
    %16 = vsyncpa [#allocation5], 0
    // Predicated region
    $region2: #{tpu_custom_call.1} parent=1 // pred_check
      _
    $region3: #{tpu_custom_call.1} parent=1 // pred_check_branch
      %18 = sbr.rel (0) target = $region5
    $region4: #{tpu_custom_call.1} parent=1 // pred_region
      %s20 = ssub.s32 128, 128
      %21 = vsyncadd [#allocation4], %s20
      %s23 = sshll.u32 [#allocation3], 4
      %s24 = int_to_ptr.vmem [resolvable:$true] %s23
      %26 = dma.hbm_to_vmem [thread:$0]  %s0, 128, %s24, [#allocation4]
    $region5: #{tpu_custom_call.1} parent=1 // pred_fallthru
      _
    // Predicated region
    $region6: #{tpu_custom_call.1} parent=1 // pred_check
      _
    $region7: #{tpu_custom_call.1} parent=1 // pred_check_branch
      %28 = sbr.rel (0) target = $region9
    $region8: #{tpu_custom_call.1} parent=1 // pred_region
      %s30 = ssub.s32 192, 192
      %31 = vsyncadd [#allocation7], %s30
      %s32 = sshll.u32 [#allocation6], 4
      %s33 = int_to_ptr.vmem [resolvable:$true] %s32
      %38 = dma.hbm_to_vmem [thread:$0]  %s1, 192, %s33, [#allocation7], 64, 64, 4
    $region9: #{tpu_custom_call.1} parent=1 // pred_fallthru
      _
    // Predicated region
    $region10: #{tpu_custom_call.1} parent=1 // pred_check
      _
    $region11: #{tpu_custom_call.1} parent=1 // pred_check_branch
      %40 = sbr.rel (0) target = $region13
    $region12: #{tpu_custom_call.1} parent=1 // pred_region
      _
    $region13: #{tpu_custom_call.1} parent=1 // pred_fallthru
      _
    // Predicated region
    $region14: #{tpu_custom_call.1} parent=1 // pred_check
      _
    $region15: #{tpu_custom_call.1} parent=1 // pred_check_branch
      %42 = sbr.rel (0) target = $region17
    $region16: #{tpu_custom_call.1} parent=1 // pred_region
      %s44 = ssub.s32 1024, 1024
      %45 = vsyncadd [#allocation7], %s44
      %s46 = sshll.u32 [#allocation8], 4
      %s47 = int_to_ptr.vmem [resolvable:$true] %s46
      %52 = dma.hbm_to_vmem [thread:$0]  %s3, 1024, %s47, [#allocation7], 64, 64, 4
    $region17: #{tpu_custom_call.1} parent=1 // pred_fallthru
      _
    // Predicated region
    $region18: #{tpu_custom_call.1} parent=1 // pred_check
      _
    $region19: #{tpu_custom_call.1} parent=1 // pred_check_branch
      %54 = sbr.rel (0) target = $region21
    $region20: #{tpu_custom_call.1} parent=1 // pred_region
      _
    $region21: #{tpu_custom_call.1} parent=1 // pred_fallthru
      _
    // Predicated region
    $region22: #{tpu_custom_call.1} parent=1 // pred_check
      _
    $region23: #{tpu_custom_call.1} parent=1 // pred_check_branch
      %56 = sbr.rel (0) target = $region25
    $region24: #{tpu_custom_call.1} parent=1 // pred_region
      _
    $region25: #{tpu_custom_call.1} parent=1 // pred_fallthru
      _
    // Predicated region
    $region26: #{tpu_custom_call.1} parent=1 // pred_check
      _
    $region27: #{tpu_custom_call.1} parent=1 // pred_check_branch
      %58 = sbr.rel (0) target = $region29
    $region28: #{tpu_custom_call.1} parent=1 // pred_region
      _
    $region29: #{tpu_custom_call.1} parent=1 // pred_fallthru
      _
    // Predicated region
    $region30: #{tpu_custom_call.1} parent=1 // pred_check
      _
    $region31: #{tpu_custom_call.1} parent=1 // pred_check_branch
      %60 = sbr.rel (0) target = $region33
    $region32: #{tpu_custom_call.1} parent=1 // pred_region
      %61 = dma.done [#allocation4], 128
    $region33: #{tpu_custom_call.1} parent=1 // pred_fallthru
      _
    // Predicated region
    $region34: #{tpu_custom_call.1} parent=1 // pred_check
      _
    $region35: #{tpu_custom_call.1} parent=1 // pred_check_branch
      %63 = sbr.rel (0) target = $region37
    $region36: #{tpu_custom_call.1} parent=1 // pred_region
      %64 = dma.done [#allocation7], 192
    $region37: #{tpu_custom_call.1} parent=1 // pred_fallthru
      _
    // Predicated region
    $region38: #{tpu_custom_call.1} parent=1 // pred_check
      _
    $region39: #{tpu_custom_call.1} parent=1 // pred_check_branch
      %66 = sbr.rel (0) target = $region41
    $region40: #{tpu_custom_call.1} parent=1 // pred_region
      %67 = dma.done [#allocation7], 1024
    $region41: #{tpu_custom_call.1} parent=1 // pred_fallthru
      _
    %v69 = vld [vmem:[#allocation3] sm:$0xff]
    %v70 = vpack.c.bf16 %v69, %v69
    %v71 = vld [vmem:[#allocation6] sm:$0xf]
    %v72 = vld [vmem:[#allocation6 + $0x4] sm:$0xf]
    %v73 = vld [vmem:[#allocation6 + $0x8] sm:$0xf]
    %v74 = vld [vmem:[%s2] sm:$0x1]
    %v76 = vlaneseq
    %v77 = vshrl.u32 %v76, 7
    %v78 = vsub.s32 0, %v77
    %v79 = vrot.slane %v74, %v78
    %v84 = vunpack.c.l.b16 %v71
    %v85 = vunpack.c.l.b16 %v72
    %v86 = vunpack.c.l.b16 %v73
    %v87 = vpack.c.b16 %v85, %v84
    %v88 = vpack.c.b16 %v86, %v86
    %vm90 = vcmask 195584
    %v92 = vsel %vm90, %v70, 0
    %vm94 = vcmask 1043456
    %v96 = vsel %vm94, %v88, 0
    %98 = vmatprep.subr.bf16.mxu0 0
    %99 = vmatpush1.bf16.msra.mxu0 0
    %100 = vmatprep.subr.bf16.mxu0 0
    %101 = vmatpush1.bf16.msra.mxu0 0
    %102 = vmatprep.subr.bf16.mxu0 0
    %103 = vmatpush1.bf16.msra.mxu0 0
    %104 = vmatprep.subr.bf16.mxu0 0
    %105 = vmatpush1.bf16.msra.mxu0 0
    %106 = vmatprep.subr.bf16.mxu0 0
    %107 = vmatpush1.bf16.msra.mxu0 0
    %108 = vmatprep.subr.bf16.mxu0 0
    %109 = vmatpush1.bf16.msra.mxu0 0
    %110 = vmatprep.subr.bf16.mxu0 0
    %111 = vmatpush1.bf16.msra.mxu0 %v96
    %112 = vmatprep.subr.bf16.mxu0 0
    %113 = vmatpush1.bf16.msra.mxu0 %v87
    %114 = vmatprep.subr.bf16.mxu0 0
    %115 = vmatpush2.bf16.msra.mxu0 0
    %116 = vmatprep.subr.bf16.mxu0 0
    %117 = vmatpush2.bf16.msra.mxu0 0
    %118 = vmatprep.subr.bf16.mxu0 0
    %119 = vmatpush2.bf16.msra.mxu0 0
    %120 = vmatprep.subr.bf16.mxu0 0
    %121 = vmatpush2.bf16.msra.mxu0 0
    %122 = vmatprep.subr.bf16.mxu0 0
    %123 = vmatpush2.bf16.msra.mxu0 0
    %124 = vmatprep.subr.bf16.mxu0 0
    %125 = vmatpush2.bf16.msra.mxu0 0
    %126 = vmatprep.subr.bf16.mxu0 0
    %127 = vmatpush2.bf16.msra.mxu0 0
    %128 = vmatprep.subr.bf16.mxu0 0
    %129 = vmatpush2.bf16.msra.mxu0 0
    %130 = vmatprep.mubr.bf16.mxu0 0
    %131 = vmatmul.mubr.bf16.gmra.mxu0 %v92
    %v132 = vpop.f32.mrf.mxu0
    %v133 = vadd.f32 %v79, %v132
    %v134 = vpop.f32.mrf.mxu0
    %v135 = vpop.f32.mrf.mxu0
    %v136 = vpop.f32.mrf.mxu0
    %137 = vdwg.mxu0
    %v138 = vmax.f32 %v133, 0.0
    %v139 = vpack.c.bf16 %v138, %v138
    %v140 = vld [vmem:[#allocation8] sm:$0xf]
    %v141 = vld [vmem:[#allocation8 + $0x4] sm:$0xf]
    %v142 = vld [vmem:[#allocation8 + $0x8] sm:$0xf]
    %v143 = vld [vmem:[#allocation8 + $0xc] sm:$0xf]
    %v144 = vld [vmem:[#allocation8 + $0x10] sm:$0xf]
    %v145 = vld [vmem:[#allocation8 + $0x14] sm:$0xf]
    %v146 = vld [vmem:[#allocation8 + $0x18] sm:$0xf]
    %v147 = vld [vmem:[#allocation8 + $0x1c] sm:$0xf]
    %v148 = vld [vmem:[#allocation8 + $0x20] sm:$0xf]
    %v149 = vld [vmem:[#allocation8 + $0x24] sm:$0xf]
    %v150 = vld [vmem:[#allocation8 + $0x28] sm:$0xf]
    %v151 = vld [vmem:[#allocation8 + $0x2c] sm:$0xf]
    %v152 = vld [vmem:[#allocation8 + $0x30] sm:$0xf]
    %v153 = vld [vmem:[#allocation8 + $0x34] sm:$0xf]
    %v154 = vld [vmem:[#allocation8 + $0x38] sm:$0xf]
    %v155 = vld [vmem:[#allocation8 + $0x3c] sm:$0xf]
    %v156 = vld [vmem:[%s4] sm:$0x1]
    %v158 = vlaneseq
    %v159 = vshrl.u32 %v158, 7
    %v160 = vsub.s32 0, %v159
    %v161 = vrot.slane %v156, %v160
    %v179 = vunpack.c.l.b16 %v140
    %v180 = vunpack.c.l.b16 %v141
    %v181 = vunpack.c.l.b16 %v142
    %v182 = vunpack.c.l.b16 %v143
    %v183 = vunpack.c.l.b16 %v144
    %v184 = vunpack.c.l.b16 %v145
    %v185 = vunpack.c.l.b16 %v146
    %v186 = vunpack.c.l.b16 %v147
    %v187 = vunpack.c.l.b16 %v148
    %v188 = vunpack.c.l.b16 %v149
    %v189 = vunpack.c.l.b16 %v150
    %v190 = vunpack.c.l.b16 %v151
    %v191 = vunpack.c.l.b16 %v152
    %v192 = vunpack.c.l.b16 %v153
    %v193 = vunpack.c.l.b16 %v154
    %v194 = vunpack.c.l.b16 %v155
    %v195 = vpack.c.b16 %v180, %v179
    %v196 = vpack.c.b16 %v182, %v181
    %v197 = vpack.c.b16 %v184, %v183
    %v198 = vpack.c.b16 %v186, %v185
    %v199 = vpack.c.b16 %v188, %v187
    %v200 = vpack.c.b16 %v190, %v189
    %v201 = vpack.c.b16 %v192, %v191
    %v202 = vpack.c.b16 %v194, %v193
    %211 = vmatprep.subr.bf16.mxu0 0
    %212 = vmatpush1.bf16.msra.mxu0 %v202
    %213 = vmatprep.subr.bf16.mxu0 0
    %214 = vmatpush1.bf16.msra.mxu0 %v201
    %215 = vmatprep.subr.bf16.mxu0 0
    %216 = vmatpush1.bf16.msra.mxu0 %v200
    %217 = vmatprep.subr.bf16.mxu0 0
    %218 = vmatpush1.bf16.msra.mxu0 %v199
    %219 = vmatprep.subr.bf16.mxu0 0
    %220 = vmatpush1.bf16.msra.mxu0 %v198
    %221 = vmatprep.subr.bf16.mxu0 0
    %222 = vmatpush1.bf16.msra.mxu0 %v197
    %223 = vmatprep.subr.bf16.mxu0 0
    %224 = vmatpush1.bf16.msra.mxu0 %v196
    %225 = vmatprep.subr.bf16.mxu0 0
    %226 = vmatpush1.bf16.msra.mxu0 %v195
    %227 = vmatprep.subr.bf16.mxu0 0
    %228 = vmatpush2.bf16.msra.mxu0 0
    %229 = vmatprep.subr.bf16.mxu0 0
    %230 = vmatpush2.bf16.msra.mxu0 0
    %231 = vmatprep.subr.bf16.mxu0 0
    %232 = vmatpush2.bf16.msra.mxu0 0
    %233 = vmatprep.subr.bf16.mxu0 0
    %234 = vmatpush2.bf16.msra.mxu0 0
    %235 = vmatprep.subr.bf16.mxu0 0
    %236 = vmatpush2.bf16.msra.mxu0 0
    %237 = vmatprep.subr.bf16.mxu0 0
    %238 = vmatpush2.bf16.msra.mxu0 0
    %239 = vmatprep.subr.bf16.mxu0 0
    %240 = vmatpush2.bf16.msra.mxu0 0
    %241 = vmatprep.subr.bf16.mxu0 0
    %242 = vmatpush2.bf16.msra.mxu0 0
    %243 = vmatprep.mubr.bf16.mxu0 0
    %244 = vmatmul.mubr.bf16.gmra.mxu0 %v139
    %v245 = vpop.f32.mrf.mxu0
    %v246 = vadd.f32 %v161, %v245
    %v247 = vpop.f32.mrf.mxu0
    %v248 = vpop.f32.mrf.mxu0
    %v249 = vpop.f32.mrf.mxu0
    %250 = vdwg.mxu0
    %v251 = vmax.f32 %v246, 0.0
    %v252 = vld [vmem:[%s5] sm:$0x1]
    %v253 = vld [vmem:[#allocation2] sm:$0x1]
    %255 = vset.pattern.permute.xlu0 0
    %256 = vperm.xlu0 %255, %v253
    %v257 = vpop.permute.xlu0 %256
    %v259 = vlaneseq
    %v260 = vshrl.u32 %v259, 7
    %v261 = vsub.s32 0, %v260
    %v262 = vrot.slane %v257, %v261
    %263 = vmatprep.subr.mxu0 0.0
    %264 = vmatpush1.xpose.msra.mxu0 0.0
    %265 = vmatprep.subr.mxu0 0.0
    %266 = vmatpush1.xpose.msra.mxu0 0.0
    %267 = vmatprep.subr.mxu0 0.0
    %268 = vmatpush1.xpose.msra.mxu0 0.0
    %269 = vmatprep.subr.mxu0 0.0
    %270 = vmatpush1.xpose.msra.mxu0 0.0
    %271 = vmatprep.subr.mxu0 0.0
    %272 = vmatpush1.xpose.msra.mxu0 0.0
    %273 = vmatprep.subr.mxu0 0.0
    %274 = vmatpush1.xpose.msra.mxu0 0.0
    %275 = vmatprep.subr.mxu0 0.0
    %276 = vmatpush1.xpose.msra.mxu0 0.0
    %277 = vmatprep.subr.mxu0 0.0
    %278 = vmatpush1.xpose.msra.mxu0 0.0
    %279 = vmatprep.subr.mxu0 0.0
    %280 = vmatpush1.xpose.msra.mxu0 0.0
    %281 = vmatprep.subr.mxu0 0.0
    %282 = vmatpush1.xpose.msra.mxu0 0.0
    %283 = vmatprep.subr.mxu0 0.0
    %284 = vmatpush1.xpose.msra.mxu0 0.0
    %285 = vmatprep.subr.mxu0 0.0
    %286 = vmatpush1.xpose.msra.mxu0 0.0
    %287 = vmatprep.subr.mxu0 0.0
    %288 = vmatpush1.xpose.msra.mxu0 0.0
    %289 = vmatprep.subr.mxu0 0.0
    %290 = vmatpush1.xpose.msra.mxu0 0.0
    %291 = vmatprep.subr.mxu0 0.0
    %292 = vmatpush1.xpose.msra.mxu0 0.0
    %293 = vmatprep.subr.mxu0 0.0
    %294 = vmatpush1.xpose.msra.mxu0 %v251
    %295 = vmatprep.subr.mxu0 0.0
    %296 = vmatpush2.xpose.msra.mxu0 0.0
    %297 = vmatprep.subr.mxu0 0.0
    %298 = vmatpush2.xpose.msra.mxu0 0.0
    %299 = vmatprep.subr.mxu0 0.0
    %300 = vmatpush2.xpose.msra.mxu0 0.0
    %301 = vmatprep.subr.mxu0 0.0
    %302 = vmatpush2.xpose.msra.mxu0 0.0
    %303 = vmatprep.subr.mxu0 0.0
    %304 = vmatpush2.xpose.msra.mxu0 0.0
    %305 = vmatprep.subr.mxu0 0.0
    %306 = vmatpush2.xpose.msra.mxu0 0.0
    %307 = vmatprep.subr.mxu0 0.0
    %308 = vmatpush2.xpose.msra.mxu0 0.0
    %309 = vmatprep.subr.mxu0 0.0
    %310 = vmatpush2.xpose.msra.mxu0 0.0
    %311 = vmatprep.subr.mxu0 0.0
    %312 = vmatpush2.xpose.msra.mxu0 0.0
    %313 = vmatprep.subr.mxu0 0.0
    %314 = vmatpush2.xpose.msra.mxu0 0.0
    %315 = vmatprep.subr.mxu0 0.0
    %316 = vmatpush2.xpose.msra.mxu0 0.0
    %317 = vmatprep.subr.mxu0 0.0
    %318 = vmatpush2.xpose.msra.mxu0 0.0
    %319 = vmatprep.subr.mxu0 0.0
    %320 = vmatpush2.xpose.msra.mxu0 0.0
    %321 = vmatprep.subr.mxu0 0.0
    %322 = vmatpush2.xpose.msra.mxu0 0.0
    %323 = vmatprep.subr.mxu0 0.0
    %324 = vmatpush2.xpose.msra.mxu0 0.0
    %325 = vmatprep.subr.mxu0 0.0
    %326 = vmatpush2.xpose.msra.mxu0 0.0
    %327 = vmatprep.mubr.f32.mxu0 0.0
    %328 = vmatmul.mubr.f32.gmra.mxu0 %v252
    %v329 = vpop.f32.mrf.mxu0
    %v330 = vadd.f32 %v262, %v329
    %v331 = vpop.f32.mrf.mxu0
    %332 = vdwg.mxu0
    %vm333 = vcmask 57344
    %334 = vst.msk [vmem:[#allocation9] sm:$0x1] %vm333, %v330
    // Predicated region
    $region42: #{tpu_custom_call.1} parent=1 // pred_check
      _
    $region43: #{tpu_custom_call.1} parent=1 // pred_check_branch
      %336 = sbr.rel (0) target = $region45
    $region44: #{tpu_custom_call.1} parent=1 // pred_region
      %s338 = ssub.s32 16, 16
      %339 = vsyncadd [#allocation5], %s338
      %s341 = sshll.u32 [#allocation9], 4
      %s342 = int_to_ptr.vmem [resolvable:$true] %s341
      %344 = dma.vmem_to_hbm [thread:$0]  %s342, 16, %s7, [#allocation5]
    $region45: #{tpu_custom_call.1} parent=1 // pred_fallthru
      _
    // Predicated region
    $region46: #{tpu_custom_call.1} parent=1 // pred_check
      _
    $region47: #{tpu_custom_call.1} parent=1 // pred_check_branch
      %346 = sbr.rel (0) target = $region49
    $region48: #{tpu_custom_call.1} parent=1 // pred_region
      %347 = dma.done [#allocation5], 16
    $region49: #{tpu_custom_call.1} parent=1 // pred_fallthru
      _
    %348 = vsyncpa [#allocation4], 1
    %349 = vsyncpa [#allocation7], 1
    %350 = vsyncpa [#allocation5], 1

</llo_original>
